<compile_context>
chip_gen: v6e
topology: v6e:2x2x1
jax: 0.10.0
libtpu: 0.0.40
codegen_flags: <defaults>
</compile_context>

<pallas_src>
import functools

import jax
import jax.numpy as jnp
from jax.experimental import pallas as pl
from jax.experimental.pallas import tpu as pltpu

_LN_EPS = 1e-5


def _patch_embed_kernel(x_ref, w_ref, b_ref, g_ref, beta_ref, o_ref, *, e_true):
    """Fused Linear + bias + LayerNorm over the (padded) embedding dim.

    x_ref   : (TILE_M, Dp)  patch rows (bf16/f32; pad lanes are zero)
    w_ref   : (Dp, Ep)      weight, VMEM-resident across the grid
    b/g/beta: (1, Ep)       bias / LN gamma / LN beta (f32, zero in pad lanes)
    o_ref   : (TILE_M, Ep)  output tile in the caller's dtype

    Correctness invariant: padded weight columns/rows, bias, gamma and beta
    lanes are EXACTLY zero, so y's pad lanes are exactly zero and the unmasked
    reductions below are equal to reductions over the true E lanes.
    """
    # MXU matmul with f32 accumulation (operands may be bf16).
    y = jnp.dot(x_ref[...], w_ref[...], preferred_element_type=jnp.float32)
    y = y + b_ref[...]

    ep = y.shape[-1]
    n_pad = ep - e_true                       # static
    inv_e = 1.0 / e_true

    # Mean over true lanes (pad lanes contribute exactly 0 to the sum).
    mean = jnp.sum(y, axis=-1, keepdims=True) * inv_e
    d = y - mean
    # Centered two-pass variance.  Pad lanes of y are exactly 0, so d there is
    # -mean; subtract their known contribution instead of masking.
    ss = jnp.sum(d * d, axis=-1, keepdims=True)
    if n_pad:
        ss = ss - float(n_pad) * (mean * mean)
    var = ss * inv_e                           # biased variance, like nn.LayerNorm

    y_norm = d * jax.lax.rsqrt(var + _LN_EPS)
    o_ref[...] = (y_norm * g_ref[...] + beta_ref[...]).astype(o_ref.dtype)


def _round_up(n, m):
    return ((n + m - 1) // m) * m


def _pick_divisor_tile(M, target, sub):
    """Largest multiple of `sub` that divides M and is <= max(target, sub)."""
    hi = min(_round_up(M, sub), _round_up(max(target, sub), sub))
    for cand in range(hi, 0, -sub):
        if M % cand == 0:
            return cand
    return None


def image_patch_embedding(x, weight, bias, gamma, beta, patch_size, *,
                          tile_m=1024, use_bf16_matmul=True):
    """x: (B, C, H, W). weight: (D, E) with D = C*patch*patch.
    Returns (B, num_patches, E) in x.dtype, matching the PyTorch module.

    NOTE: use_bf16_matmul=True downcasts matmul operands to bf16 (f32 MXU
    accumulation).  Pass False for full f32 operand precision.
    """
    B, C, H, W = x.shape
    h = H // patch_size
    w = W // patch_size
    D = C * patch_size * patch_size
    E = weight.shape[1]
    M = B * h * w

    op_dtype = jnp.bfloat16 if use_bf16_matmul else x.dtype
    out_dtype = x.dtype
    op_bytes = jnp.dtype(op_dtype).itemsize
    out_bytes = jnp.dtype(out_dtype).itemsize

    # Lane-dense padding: last dims presented to the kernel are multiples of
    # 128.  (Intentionally NOT 256: zero lanes don't cut MXU passes, they only
    # add HBM bytes + LN work on the memory-bound v6e/v7x path.)
    Dp = _round_up(D, 128)
    Ep = _round_up(E, 128)

    # ---- Chip-aware VMEM budget -------------------------------------------
    try:
        vmem_cap = int(pltpu.get_tpu_info().vmem_capacity_bytes)
    except Exception:
        vmem_cap = 64 * 1024 * 1024          # v7x per-TC size: safe everywhere

    # Resident constants (conservatively assume 2 weight buffers) + per-row
    # streaming cost (double-buffered x/out tiles + f32 LN temporaries).
    resident = 2 * Dp * Ep * op_bytes + 6 * Ep * 4
    per_row = 2 * Dp * op_bytes + 2 * Ep * out_bytes + 4 * Ep * 4

    # ---- Tile-M selection --------------------------------------------------
    sub = 16 if op_dtype == jnp.bfloat16 else 8   # sublane packing granularity
    if M >= 4096:
        # Keep >= ~8 grid steps so the pipeline (and both v7x TCs under the
        # "parallel" axis) always have work.
        target = min(tile_m, max(512, M // 8))
    else:
        target = min(tile_m, M)
    target = max(sub, target)

    row_budget = max(int(0.6 * vmem_cap) - resident, per_row * sub)
    max_rows = max(sub, (row_budget // per_row) // sub * sub)
    target = min(target, max_rows)

    # Prefer a tile that divides M exactly: no M-pad copy, no output slice.
    tm = _pick_divisor_tile(M, target, sub)
    if tm is not None:
        Mp = M
    else:
        tm = _round_up(min(target, M), sub)
        Mp = _round_up(M, tm)

    vmem_needed = resident + tm * per_row
    vmem_limit = int(min(max(int(1.5 * vmem_needed), 32 * 1024 * 1024),
                         int(0.85 * vmem_cap), 100 * 1024 * 1024))

    # ---- Rearrange (XLA glue) ---------------------------------------------
    # 'b c (h p1) (w p2) -> (b h w) (c p1 p2)' is a minor-dim transpose that
    # XLA materializes; cast to the matmul dtype FIRST so the materialized
    # copy is 2-byte, and fold all padding into the same producer chain.
    xc = x.astype(op_dtype)
    patches = xc.reshape(B, C, h, patch_size, w, patch_size)
    patches = patches.transpose(0, 2, 4, 1, 3, 5)          # (B, h, w, C, p1, p2)
    flat = patches.reshape(M, D)
    if Dp != D or Mp != M:
        flat = jnp.pad(flat, ((0, Mp - M), (0, Dp - D)))

    # Zero-padding of weight/bias/gamma/beta is load-bearing: it is what makes
    # y's pad lanes exactly zero (see kernel docstring).  Keep pads zero.
    w_p = weight.astype(op_dtype)
    if Dp != D or Ep != E:
        w_p = jnp.pad(w_p, ((0, Dp - D), (0, Ep - E)))
    b2 = jnp.pad(bias.astype(jnp.float32), (0, Ep - E)).reshape(1, Ep)
    g2 = jnp.pad(gamma.astype(jnp.float32), (0, Ep - E)).reshape(1, Ep)
    beta2 = jnp.pad(beta.astype(jnp.float32), (0, Ep - E)).reshape(1, Ep)

    # ---- pallas_call -------------------------------------------------------
    grid = (Mp // tm,)

    def _make_call(single_buffer_consts):
        def const_spec(shape):
            kwargs = {}
            if single_buffer_consts:
                # Constant index_map -> one VMEM buffer is enough; frees
                # headroom (matters most on v7x's 64 MiB/TC).
                kwargs["pipeline_mode"] = pl.Buffered(1)
            return pl.BlockSpec(shape, lambda i: (0,) * len(shape), **kwargs)

        # TODO(synk): verify in xprof that the "parallel" M axis shards across
        # both v7x TensorCores; switch to pltpu.CORE_PARALLEL if one TC idles.
        return pl.pallas_call(
            functools.partial(_patch_embed_kernel, e_true=E),
            out_shape=jax.ShapeDtypeStruct((Mp, Ep), out_dtype),
            grid=grid,
            in_specs=[
                pl.BlockSpec((tm, Dp), lambda i: (i, 0)),   # x tiles stream
                const_spec((Dp, Ep)),                       # weight resident
                const_spec((1, Ep)),                        # bias resident
                const_spec((1, Ep)),                        # gamma resident
                const_spec((1, Ep)),                        # beta resident
            ],
            out_specs=pl.BlockSpec((tm, Ep), lambda i: (i, 0)),
            compiler_params=pltpu.CompilerParams(
                dimension_semantics=("parallel",),
                vmem_limit_bytes=vmem_limit,
                allow_input_fusion=[True, False, False, False, False],
            ),
        )

    try:
        out = _make_call(True)(flat, w_p, b2, g2, beta2)
    except Exception:
        # Older Pallas may reject pipeline_mode=pl.Buffered(1); the fallback
        # only costs one extra VMEM buffer per constant operand.
        out = _make_call(False)(flat, w_p, b2, g2, beta2)

    if Mp != M or Ep != E:
        out = out[:M, :E]
    return out.reshape(B, h * w, E)            # already x.dtype; free reshape


if __name__ == "__main__":
    # Small shapes consistent with the module defaults (scaled down spatially).
    B, C, IMG, PATCH, EMBED = 2, 3, 16, 4, 48
    D = C * PATCH * PATCH  # 48

    key = jax.random.PRNGKey(0)
    kx, kw, kb = jax.random.split(key, 3)

    x = jax.random.normal(kx, (B, C, IMG, IMG), dtype=jnp.float32)

    # Deterministic synthetic parameters (Linear weight stored as (D, E)).
    bound = 1.0 / (D ** 0.5)
    weight = jax.random.uniform(kw, (D, EMBED), minval=-bound, maxval=bound,
                                dtype=jnp.float32)
    bias = jax.random.uniform(kb, (EMBED,), minval=-bound, maxval=bound,
                              dtype=jnp.float32)
    gamma = jnp.ones((EMBED,), dtype=jnp.float32)
    beta = jnp.zeros((EMBED,), dtype=jnp.float32)

    out = image_patch_embedding(x, weight, bias, gamma, beta, PATCH)
    out = jax.block_until_ready(out)

    # Reference in plain JAX (full f32 precision).
    h = w = IMG // PATCH
    p = x.reshape(B, C, h, PATCH, w, PATCH).transpose(0, 2, 4, 1, 3, 5)
    p = p.reshape(B, h * w, D)
    y = jnp.dot(p, weight, precision=jax.lax.Precision.HIGHEST) + bias
    mu = y.mean(-1, keepdims=True)
    var = ((y - mu) ** 2).mean(-1, keepdims=True)
    ref = (y - mu) / jnp.sqrt(var + 1e-5) * gamma + beta

    assert out.shape == (B, h * w, EMBED)
    assert out.dtype == x.dtype
    # bf16 matmul operands (f32 accumulation) -> slightly looser tolerance.
    max_err = float(jnp.max(jnp.abs(out - ref)))
    assert jnp.allclose(out, ref, atol=3e-2, rtol=3e-2), max_err

    print("KERNEL_OK")
</pallas_src>

<mosaic_0001>
module attributes {stable_mosaic.version = 11 : i64} {
  func.func @_patch_embed_kernel(%arg0: i32, %arg1: memref<32x128xbf16, #tpu.memory_space<vmem>>, %arg2: memref<128x128xbf16, #tpu.memory_space<vmem>>, %arg3: memref<1x128xf32, #tpu.memory_space<vmem>>, %arg4: memref<1x128xf32, #tpu.memory_space<vmem>>, %arg5: memref<1x128xf32, #tpu.memory_space<vmem>>, %arg6: memref<32x128xf32, #tpu.memory_space<vmem>>) attributes {dimension_semantics = [#tpu.dimension_semantics<parallel>], iteration_bounds = array<i64: 1>, scalar_prefetch = 0 : i64, scratch_operands = 0 : i64, tpu.core_type = #tpu.core_type<tc>, window_params = [{transform_indices = @transform_0, window_bounds = array<i64: 32, 128>}, {pipeline_mode = #tpu.pipeline_mode<synchronous>, transform_indices = @transform_1, window_bounds = array<i64: 128, 128>}, {pipeline_mode = #tpu.pipeline_mode<synchronous>, transform_indices = @transform_2, window_bounds = array<i64: 1, 128>}, {pipeline_mode = #tpu.pipeline_mode<synchronous>, transform_indices = @transform_3, window_bounds = array<i64: 1, 128>}, {pipeline_mode = #tpu.pipeline_mode<synchronous>, transform_indices = @transform_4, window_bounds = array<i64: 1, 128>}, {transform_indices = @transform_5, window_bounds = array<i64: 32, 128>}]} {
    %c0 = arith.constant 0 : index
    %c0_0 = arith.constant 0 : index
    %0 = vector.load %arg1[%c0, %c0_0] : memref<32x128xbf16, #tpu.memory_space<vmem>>, vector<32x128xbf16>
    %c0_1 = arith.constant 0 : index
    %c0_2 = arith.constant 0 : index
    %1 = vector.load %arg2[%c0_1, %c0_2] : memref<128x128xbf16, #tpu.memory_space<vmem>>, vector<128x128xbf16>
    %cst = arith.constant dense<0.000000e+00> : vector<32x128xf32>
    %2 = tpu.matmul %0, %1, %cst {dimension_numbers = #tpu.dot_dimension_numbers<[1], [0], [0], [1], [0, 0, 1, 1], [], []>} : vector<32x128xbf16>, vector<128x128xbf16>, vector<32x128xf32> -> vector<32x128xf32>
    %c0_3 = arith.constant 0 : index
    %c0_4 = arith.constant 0 : index
    %3 = vector.load %arg3[%c0_3, %c0_4] : memref<1x128xf32, #tpu.memory_space<vmem>>, vector<1x128xf32>
    %4 = vector.broadcast %3 : vector<1x128xf32> to vector<32x128xf32>
    %5 = arith.addf %2, %4 : vector<32x128xf32>
    %cst_5 = arith.constant dense<0.000000e+00> : vector<32xf32>
    %6 = vector.multi_reduction <add>, %5, %cst_5 [1] : vector<32x128xf32> to vector<32xf32>
    %7 = vector.shape_cast %6 : vector<32xf32> to vector<32x1xf32>
    %cst_6 = arith.constant 0.020833334 : f32
    %8 = vector.broadcast %cst_6 : f32 to vector<32x1xf32>
    %9 = arith.mulf %7, %8 : vector<32x1xf32>
    %10 = vector.broadcast %9 : vector<32x1xf32> to vector<32x128xf32>
    %11 = arith.subf %5, %10 : vector<32x128xf32>
    %12 = arith.mulf %11, %11 : vector<32x128xf32>
    %cst_7 = arith.constant dense<0.000000e+00> : vector<32xf32>
    %13 = vector.multi_reduction <add>, %12, %cst_7 [1] : vector<32x128xf32> to vector<32xf32>
    %14 = vector.shape_cast %13 : vector<32xf32> to vector<32x1xf32>
    %15 = arith.mulf %9, %9 : vector<32x1xf32>
    %cst_8 = arith.constant 8.000000e+01 : f32
    %16 = vector.broadcast %cst_8 : f32 to vector<32x1xf32>
    %17 = arith.mulf %16, %15 : vector<32x1xf32>
    %18 = arith.subf %14, %17 : vector<32x1xf32>
    %cst_9 = arith.constant 0.020833334 : f32
    %19 = vector.broadcast %cst_9 : f32 to vector<32x1xf32>
    %20 = arith.mulf %18, %19 : vector<32x1xf32>
    %cst_10 = arith.constant 9.99999974E-6 : f32
    %21 = vector.broadcast %cst_10 : f32 to vector<32x1xf32>
    %22 = arith.addf %20, %21 : vector<32x1xf32>
    %23 = math.rsqrt %22 : vector<32x1xf32>
    %24 = vector.broadcast %23 : vector<32x1xf32> to vector<32x128xf32>
    %25 = arith.mulf %11, %24 : vector<32x128xf32>
    %c0_11 = arith.constant 0 : index
    %c0_12 = arith.constant 0 : index
    %26 = vector.load %arg4[%c0_11, %c0_12] : memref<1x128xf32, #tpu.memory_space<vmem>>, vector<1x128xf32>
    %27 = vector.broadcast %26 : vector<1x128xf32> to vector<32x128xf32>
    %28 = arith.mulf %25, %27 : vector<32x128xf32>
    %c0_13 = arith.constant 0 : index
    %c0_14 = arith.constant 0 : index
    %29 = vector.load %arg5[%c0_13, %c0_14] : memref<1x128xf32, #tpu.memory_space<vmem>>, vector<1x128xf32>
    %30 = vector.broadcast %29 : vector<1x128xf32> to vector<32x128xf32>
    %31 = arith.addf %28, %30 : vector<32x128xf32>
    %c0_15 = arith.constant 0 : index
    %c0_16 = arith.constant 0 : index
    %32 = vector.load %arg6[%c0_15, %c0_16] : memref<32x128xf32, #tpu.memory_space<vmem>>, vector<32x128xf32>
    tpu.vector_store %arg6[%c0_15, %c0_16], %31 {strides = array<i32>} : memref<32x128xf32, #tpu.memory_space<vmem>>, vector<32x128xf32>,
    return
  }
  func.func @transform_0(%arg0: i32) -> (i32, i32) {
    %c0_i32 = arith.constant 0 : i32
    %c0_i32_0 = arith.constant 0 : i32
    return %arg0, %c0_i32 : i32, i32
  }
  func.func @transform_1(%arg0: i32) -> (i32, i32) {
    %c0_i32 = arith.constant 0 : i32
    %c0_i32_0 = arith.constant 0 : i32
    %c0_i32_1 = arith.constant 0 : i32
    return %c0_i32, %c0_i32_0 : i32, i32
  }
  func.func @transform_2(%arg0: i32) -> (i32, i32) {
    %c0_i32 = arith.constant 0 : i32
    %c0_i32_0 = arith.constant 0 : i32
    %c0_i32_1 = arith.constant 0 : i32
    return %c0_i32, %c0_i32_0 : i32, i32
  }
  func.func @transform_3(%arg0: i32) -> (i32, i32) {
    %c0_i32 = arith.constant 0 : i32
    %c0_i32_0 = arith.constant 0 : i32
    %c0_i32_1 = arith.constant 0 : i32
    return %c0_i32, %c0_i32_0 : i32, i32
  }
  func.func @transform_4(%arg0: i32) -> (i32, i32) {
    %c0_i32 = arith.constant 0 : i32
    %c0_i32_0 = arith.constant 0 : i32
    %c0_i32_1 = arith.constant 0 : i32
    return %c0_i32, %c0_i32_0 : i32, i32
  }
  func.func @transform_5(%arg0: i32) -> (i32, i32) {
    %c0_i32 = arith.constant 0 : i32
    %c0_i32_0 = arith.constant 0 : i32
    return %arg0, %c0_i32 : i32, i32
  }
}

module attributes {stable_mosaic.version = 11 : i64} {
  func.func @_patch_embed_kernel(%arg0: i32, %arg1: memref<32x128xbf16, #tpu.memory_space<vmem>>, %arg2: memref<128x128xbf16, #tpu.memory_space<vmem>>, %arg3: memref<1x128xf32, #tpu.memory_space<vmem>>, %arg4: memref<1x128xf32, #tpu.memory_space<vmem>>, %arg5: memref<1x128xf32, #tpu.memory_space<vmem>>, %arg6: memref<32x128xf32, #tpu.memory_space<vmem>>) attributes {dimension_semantics = [#tpu.dimension_semantics<parallel>], iteration_bounds = array<i64: 1>, scalar_prefetch = 0 : i64, scratch_operands = 0 : i64, tpu.core_type = #tpu.core_type<tc>, window_params = [{transform_indices = @transform_0, window_bounds = array<i64: 32, 128>}, {pipeline_mode = #tpu.pipeline_mode<synchronous>, transform_indices = @transform_1, window_bounds = array<i64: 128, 128>}, {pipeline_mode = #tpu.pipeline_mode<synchronous>, transform_indices = @transform_2, window_bounds = array<i64: 1, 128>}, {pipeline_mode = #tpu.pipeline_mode<synchronous>, transform_indices = @transform_3, window_bounds = array<i64: 1, 128>}, {pipeline_mode = #tpu.pipeline_mode<synchronous>, transform_indices = @transform_4, window_bounds = array<i64: 1, 128>}, {transform_indices = @transform_5, window_bounds = array<i64: 32, 128>}]} {
    %c0 = arith.constant 0 : index
    %c0_0 = arith.constant 0 : index
    %0 = vector.load %arg1[%c0, %c0_0] : memref<32x128xbf16, #tpu.memory_space<vmem>>, vector<32x128xbf16>
    %c0_1 = arith.constant 0 : index
    %c0_2 = arith.constant 0 : index
    %1 = vector.load %arg2[%c0_1, %c0_2] : memref<128x128xbf16, #tpu.memory_space<vmem>>, vector<128x128xbf16>
    %cst = arith.constant dense<0.000000e+00> : vector<32x128xf32>
    %2 = tpu.matmul %0, %1, %cst {dimension_numbers = #tpu.dot_dimension_numbers<[1], [0], [0], [1], [0, 0, 1, 1], [], []>} : vector<32x128xbf16>, vector<128x128xbf16>, vector<32x128xf32> -> vector<32x128xf32>
    %c0_3 = arith.constant 0 : index
    %c0_4 = arith.constant 0 : index
    %3 = vector.load %arg3[%c0_3, %c0_4] : memref<1x128xf32, #tpu.memory_space<vmem>>, vector<1x128xf32>
    %4 = vector.broadcast %3 : vector<1x128xf32> to vector<32x128xf32>
    %5 = arith.addf %2, %4 : vector<32x128xf32>
    %cst_5 = arith.constant dense<0.000000e+00> : vector<32xf32>
    %6 = vector.multi_reduction <add>, %5, %cst_5 [1] : vector<32x128xf32> to vector<32xf32>
    %7 = vector.shape_cast %6 : vector<32xf32> to vector<32x1xf32>
    %cst_6 = arith.constant 0.020833334 : f32
    %8 = vector.broadcast %cst_6 : f32 to vector<32x1xf32>
    %9 = arith.mulf %7, %8 : vector<32x1xf32>
    %10 = vector.broadcast %9 : vector<32x1xf32> to vector<32x128xf32>
    %11 = arith.subf %5, %10 : vector<32x128xf32>
    %12 = arith.mulf %11, %11 : vector<32x128xf32>
    %cst_7 = arith.constant dense<0.000000e+00> : vector<32xf32>
    %13 = vector.multi_reduction <add>, %12, %cst_7 [1] : vector<32x128xf32> to vector<32xf32>
    %14 = vector.shape_cast %13 : vector<32xf32> to vector<32x1xf32>
    %15 = arith.mulf %9, %9 : vector<32x1xf32>
    %cst_8 = arith.constant 8.000000e+01 : f32
    %16 = vector.broadcast %cst_8 : f32 to vector<32x1xf32>
    %17 = arith.mulf %16, %15 : vector<32x1xf32>
    %18 = arith.subf %14, %17 : vector<32x1xf32>
    %cst_9 = arith.constant 0.020833334 : f32
    %19 = vector.broadcast %cst_9 : f32 to vector<32x1xf32>
    %20 = arith.mulf %18, %19 : vector<32x1xf32>
    %cst_10 = arith.constant 9.99999974E-6 : f32
    %21 = vector.broadcast %cst_10 : f32 to vector<32x1xf32>
    %22 = arith.addf %20, %21 : vector<32x1xf32>
    %23 = math.rsqrt %22 : vector<32x1xf32>
    %24 = vector.broadcast %23 : vector<32x1xf32> to vector<32x128xf32>
    %25 = arith.mulf %11, %24 : vector<32x128xf32>
    %c0_11 = arith.constant 0 : index
    %c0_12 = arith.constant 0 : index
    %26 = vector.load %arg4[%c0_11, %c0_12] : memref<1x128xf32, #tpu.memory_space<vmem>>, vector<1x128xf32>
    %27 = vector.broadcast %26 : vector<1x128xf32> to vector<32x128xf32>
    %28 = arith.mulf %25, %27 : vector<32x128xf32>
    %c0_13 = arith.constant 0 : index
    %c0_14 = arith.constant 0 : index
    %29 = vector.load %arg5[%c0_13, %c0_14] : memref<1x128xf32, #tpu.memory_space<vmem>>, vector<1x128xf32>
    %30 = vector.broadcast %29 : vector<1x128xf32> to vector<32x128xf32>
    %31 = arith.addf %28, %30 : vector<32x128xf32>
    %c0_15 = arith.constant 0 : index
    %c0_16 = arith.constant 0 : index
    %32 = vector.load %arg6[%c0_15, %c0_16] : memref<32x128xf32, #tpu.memory_space<vmem>>, vector<32x128xf32>
    tpu.vector_store %arg6[%c0_15, %c0_16], %31 {strides = array<i32>} : memref<32x128xf32, #tpu.memory_space<vmem>>, vector<32x128xf32>,
    return
  }
  func.func @transform_0(%arg0: i32) -> (i32, i32) {
    %c0_i32 = arith.constant 0 : i32
    %c0_i32_0 = arith.constant 0 : i32
    return %arg0, %c0_i32 : i32, i32
  }
  func.func @transform_1(%arg0: i32) -> (i32, i32) {
    %c0_i32 = arith.constant 0 : i32
    %c0_i32_0 = arith.constant 0 : i32
    %c0_i32_1 = arith.constant 0 : i32
    return %c0_i32, %c0_i32_0 : i32, i32
  }
  func.func @transform_2(%arg0: i32) -> (i32, i32) {
    %c0_i32 = arith.constant 0 : i32
    %c0_i32_0 = arith.constant 0 : i32
    %c0_i32_1 = arith.constant 0 : i32
    return %c0_i32, %c0_i32_0 : i32, i32
  }
  func.func @transform_3(%arg0: i32) -> (i32, i32) {
    %c0_i32 = arith.constant 0 : i32
    %c0_i32_0 = arith.constant 0 : i32
    %c0_i32_1 = arith.constant 0 : i32
    return %c0_i32, %c0_i32_0 : i32, i32
  }
  func.func @transform_4(%arg0: i32) -> (i32, i32) {
    %c0_i32 = arith.constant 0 : i32
    %c0_i32_0 = arith.constant 0 : i32
    %c0_i32_1 = arith.constant 0 : i32
    return %c0_i32, %c0_i32_0 : i32, i32
  }
  func.func @transform_5(%arg0: i32) -> (i32, i32) {
    %c0_i32 = arith.constant 0 : i32
    %c0_i32_0 = arith.constant 0 : i32
    return %arg0, %c0_i32 : i32, i32
  }
}

</mosaic_0001>

<llo_original>
// kernel: tpu_custom_call.1
$region0: #{tpu_custom_call.1}
  #allocation0 [shape = 'u32[]', space=smem, size = 0x4, offset = 0x4, fixed_abs, tag = 'smem constant byte address 0x4 - core index']
  #allocation1 [shape = 'u32[144,128]{1,0:T(1,128)}', space=vmem, size = 0x12000, scoped, tag = 'internal scratch']
  %s0 = inlined_call_operand.hbm [shape: bf16[32,128], index: 0, kind: input, shape index: {}]
  %s1 = inlined_call_operand.hbm [shape: bf16[128,128], index: 1, kind: input, shape index: {}]
  %s2 = inlined_call_operand.vmem [shape: f32[1,128], index: 2, kind: input, shape index: {}]
  %s3 = inlined_call_operand.vmem [shape: f32[1,128], index: 3, kind: input, shape index: {}]
  %s4 = inlined_call_operand.vmem [shape: f32[1,128], index: 4, kind: input, shape index: {}]
  %s5 = inlined_call_operand.hbm [shape: f32[32,128], index: 5, kind: output, shape index: {}]
  %s6 = sld [smem:[#allocation0]]
  $region38: #{tpu_custom_call.1} parent=0
    _
  %s8 = ssub.s32 1, %s6
  %s9 = scalar_select 0, %s8, %s6
  $region1: #{tpu_custom_call.1} parent=0
    #allocation2 [shape = 'u8[8192]{0}', space=vmem, size = 0x2000, scoped, tag = 'input window, operand 0, single buffered']
    #allocation3 [shape = 's32[1]{0}', space=sflag, size = 0x4, scoped, tag = 'scoped memory for tpu_custom_call.1']
    #allocation4 [shape = 's32[1]{0}', space=sflag, size = 0x4, scoped, tag = 'scoped memory for tpu_custom_call.1']
    #allocation5 [shape = 'u8[32768]{0}', space=vmem, size = 0x8000, scoped, tag = 'input window, operand 1, single buffered']
    #allocation6 [shape = 's32[1]{0}', space=sflag, size = 0x4, scoped, tag = 'scoped memory for tpu_custom_call.1']
    #allocation7 [shape = 'u8[16384]{0}', space=vmem, size = 0x4000, scoped, tag = 'output window, operand 0, single buffered']
    %10 = vsyncpa [#allocation3], 0
    %11 = vsyncpa [#allocation6], 0
    %12 = vsyncpa [#allocation4], 0
    // Predicated region
    $region2: #{tpu_custom_call.1} parent=1 // pred_check
      _
    $region3: #{tpu_custom_call.1} parent=1 // pred_check_branch
      %14 = sbr.rel (0) target = $region5
    $region4: #{tpu_custom_call.1} parent=1 // pred_region
      %s16 = ssub.s32 256, 256
      %17 = vsyncadd [#allocation3], %s16
      %s18 = sshll.u32 [#allocation2], 4
      %s19 = int_to_ptr.vmem [resolvable:$true] %s18
      %24 = dma.hbm_to_vmem [thread:$0]  %s0, 256, %s19, [#allocation3], 64, 64, 4
    $region5: #{tpu_custom_call.1} parent=1 // pred_fallthru
      _
    // Predicated region
    $region6: #{tpu_custom_call.1} parent=1 // pred_check
      _
    $region7: #{tpu_custom_call.1} parent=1 // pred_check_branch
      %26 = sbr.rel (0) target = $region9
    $region8: #{tpu_custom_call.1} parent=1 // pred_region
      %s28 = ssub.s32 1024, 1024
      %29 = vsyncadd [#allocation6], %s28
      %s30 = sshll.u32 [#allocation5], 4
      %s31 = int_to_ptr.vmem [resolvable:$true] %s30
      %36 = dma.hbm_to_vmem [thread:$0]  %s1, 1024, %s31, [#allocation6], 64, 64, 4
    $region9: #{tpu_custom_call.1} parent=1 // pred_fallthru
      _
    // Predicated region
    $region10: #{tpu_custom_call.1} parent=1 // pred_check
      _
    $region11: #{tpu_custom_call.1} parent=1 // pred_check_branch
      %38 = sbr.rel (0) target = $region13
    $region12: #{tpu_custom_call.1} parent=1 // pred_region
      _
    $region13: #{tpu_custom_call.1} parent=1 // pred_fallthru
      _
    // Predicated region
    $region14: #{tpu_custom_call.1} parent=1 // pred_check
      _
    $region15: #{tpu_custom_call.1} parent=1 // pred_check_branch
      %40 = sbr.rel (0) target = $region17
    $region16: #{tpu_custom_call.1} parent=1 // pred_region
      _
    $region17: #{tpu_custom_call.1} parent=1 // pred_fallthru
      _
    // Predicated region
    $region18: #{tpu_custom_call.1} parent=1 // pred_check
      _
    $region19: #{tpu_custom_call.1} parent=1 // pred_check_branch
      %42 = sbr.rel (0) target = $region21
    $region20: #{tpu_custom_call.1} parent=1 // pred_region
      _
    $region21: #{tpu_custom_call.1} parent=1 // pred_fallthru
      _
    // Predicated region
    $region22: #{tpu_custom_call.1} parent=1 // pred_check
      _
    $region23: #{tpu_custom_call.1} parent=1 // pred_check_branch
      %44 = sbr.rel (0) target = $region25
    $region24: #{tpu_custom_call.1} parent=1 // pred_region
      %45 = dma.done [#allocation3], 256
    $region25: #{tpu_custom_call.1} parent=1 // pred_fallthru
      _
    // Predicated region
    $region26: #{tpu_custom_call.1} parent=1 // pred_check
      _
    $region27: #{tpu_custom_call.1} parent=1 // pred_check_branch
      %47 = sbr.rel (0) target = $region29
    $region28: #{tpu_custom_call.1} parent=1 // pred_region
      %48 = dma.done [#allocation6], 1024
    $region29: #{tpu_custom_call.1} parent=1 // pred_fallthru
      _
    %v50 = vld [vmem:[#allocation2] sm:$0xf]
    %v51 = vld [vmem:[#allocation2 + $0x4] sm:$0xf]
    %v52 = vld [vmem:[#allocation2 + $0x8] sm:$0xf]
    %v53 = vld [vmem:[#allocation2 + $0xc] sm:$0xf]
    %v54 = vld [vmem:[#allocation5] sm:$0xf]
    %v55 = vld [vmem:[#allocation5 + $0x4] sm:$0xf]
    %v56 = vld [vmem:[#allocation5 + $0x8] sm:$0xf]
    %v57 = vld [vmem:[#allocation5 + $0xc] sm:$0xf]
    %v58 = vld [vmem:[#allocation5 + $0x10] sm:$0xf]
    %v59 = vld [vmem:[#allocation5 + $0x14] sm:$0xf]
    %v60 = vld [vmem:[#allocation5 + $0x18] sm:$0xf]
    %v61 = vld [vmem:[#allocation5 + $0x1c] sm:$0xf]
    %v62 = vld [vmem:[#allocation5 + $0x20] sm:$0xf]
    %v63 = vld [vmem:[#allocation5 + $0x24] sm:$0xf]
    %v64 = vld [vmem:[#allocation5 + $0x28] sm:$0xf]
    %v65 = vld [vmem:[#allocation5 + $0x2c] sm:$0xf]
    %v66 = vld [vmem:[#allocation5 + $0x30] sm:$0xf]
    %v67 = vld [vmem:[#allocation5 + $0x34] sm:$0xf]
    %v68 = vld [vmem:[#allocation5 + $0x38] sm:$0xf]
    %v69 = vld [vmem:[#allocation5 + $0x3c] sm:$0xf]
    %v70 = vld [vmem:[%s2] sm:$0x1]
    %v72 = vlaneseq
    %v73 = vshrl.u32 %v72, 7
    %v74 = vsub.s32 0, %v73
    %v75 = vrot.slane %v70, %v74
    %v81 = vunpack.c.l.b16 %v50
    %v82 = vunpack.c.l.b16 %v51
    %v83 = vunpack.c.l.b16 %v52
    %v84 = vunpack.c.l.b16 %v53
    %v85 = vpack.c.b16 %v82, %v81
    %v86 = vpack.c.b16 %v84, %v83
    %v105 = vunpack.c.l.b16 %v54
    %v106 = vunpack.c.l.b16 %v55
    %v107 = vunpack.c.l.b16 %v56
    %v108 = vunpack.c.l.b16 %v57
    %v109 = vunpack.c.l.b16 %v58
    %v110 = vunpack.c.l.b16 %v59
    %v111 = vunpack.c.l.b16 %v60
    %v112 = vunpack.c.l.b16 %v61
    %v113 = vunpack.c.l.b16 %v62
    %v114 = vunpack.c.l.b16 %v63
    %v115 = vunpack.c.l.b16 %v64
    %v116 = vunpack.c.l.b16 %v65
    %v117 = vunpack.c.l.b16 %v66
    %v118 = vunpack.c.l.b16 %v67
    %v119 = vunpack.c.l.b16 %v68
    %v120 = vunpack.c.l.b16 %v69
    %v121 = vpack.c.b16 %v106, %v105
    %v122 = vpack.c.b16 %v108, %v107
    %v123 = vpack.c.b16 %v110, %v109
    %v124 = vpack.c.b16 %v112, %v111
    %v125 = vpack.c.b16 %v114, %v113
    %v126 = vpack.c.b16 %v116, %v115
    %v127 = vpack.c.b16 %v118, %v117
    %v128 = vpack.c.b16 %v120, %v119
    %137 = vmatprep.subr.bf16.mxu0 0
    %138 = vmatpush1.bf16.msra.mxu0 %v128
    %139 = vmatprep.subr.bf16.mxu0 0
    %140 = vmatpush1.bf16.msra.mxu0 %v127
    %141 = vmatprep.subr.bf16.mxu0 0
    %142 = vmatpush1.bf16.msra.mxu0 %v126
    %143 = vmatprep.subr.bf16.mxu0 0
    %144 = vmatpush1.bf16.msra.mxu0 %v125
    %145 = vmatprep.subr.bf16.mxu0 0
    %146 = vmatpush1.bf16.msra.mxu0 %v124
    %147 = vmatprep.subr.bf16.mxu0 0
    %148 = vmatpush1.bf16.msra.mxu0 %v123
    %149 = vmatprep.subr.bf16.mxu0 0
    %150 = vmatpush1.bf16.msra.mxu0 %v122
    %151 = vmatprep.subr.bf16.mxu0 0
    %152 = vmatpush1.bf16.msra.mxu0 %v121
    %153 = vmatprep.subr.bf16.mxu0 0
    %154 = vmatpush2.bf16.msra.mxu0 0
    %155 = vmatprep.subr.bf16.mxu0 0
    %156 = vmatpush2.bf16.msra.mxu0 0
    %157 = vmatprep.subr.bf16.mxu0 0
    %158 = vmatpush2.bf16.msra.mxu0 0
    %159 = vmatprep.subr.bf16.mxu0 0
    %160 = vmatpush2.bf16.msra.mxu0 0
    %161 = vmatprep.subr.bf16.mxu0 0
    %162 = vmatpush2.bf16.msra.mxu0 0
    %163 = vmatprep.subr.bf16.mxu0 0
    %164 = vmatpush2.bf16.msra.mxu0 0
    %165 = vmatprep.subr.bf16.mxu0 0
    %166 = vmatpush2.bf16.msra.mxu0 0
    %167 = vmatprep.subr.bf16.mxu0 0
    %168 = vmatpush2.bf16.msra.mxu0 0
    %169 = vmatprep.mubr.bf16.mxu0 0
    %170 = vmatmul.mubr.bf16.gmra.mxu0 %v85
    %v171 = vpop.f32.mrf.mxu0
    %v172 = vadd.f32 %v75, %v171
    %v173 = vpop.f32.mrf.mxu0
    %v174 = vpop.f32.mrf.mxu0
    %v175 = vadd.f32 %v75, %v174
    %v176 = vpop.f32.mrf.mxu0
    %177 = vmatprep.mubr.bf16.mxu0 0
    %178 = vmatmul.mubr.bf16.gmra.mxu0 %v86
    %v179 = vpop.f32.mrf.mxu0
    %v180 = vadd.f32 %v75, %v179
    %v181 = vpop.f32.mrf.mxu0
    %v182 = vpop.f32.mrf.mxu0
    %v183 = vadd.f32 %v75, %v182
    %v184 = vpop.f32.mrf.mxu0
    %185 = vdwg.mxu0
    %186 = vadd.xlane.f32.xlu0 %v172
    %v187 = vpop.xlane.xlu0 %186
    %188 = vadd.xlane.f32.xlu0 %v175
    %v189 = vpop.xlane.xlu0 %188
    %190 = vadd.xlane.f32.xlu0 %v180
    %v191 = vpop.xlane.xlu0 %190
    %192 = vadd.xlane.f32.xlu0 %v183
    %v193 = vpop.xlane.xlu0 %192
    %v194 = vmul.f32 %v187, 0.020833334
    %v195 = vmul.f32 %v189, 0.020833334
    %v196 = vmul.f32 %v191, 0.020833334
    %v197 = vmul.f32 %v193, 0.020833334
    %v198 = vsub.f32 %v172, %v194
    %v199 = vsub.f32 %v175, %v195
    %v200 = vsub.f32 %v180, %v196
    %v201 = vsub.f32 %v183, %v197
    %v202 = vmul.f32 %v198, %v198
    %v203 = vmul.f32 %v199, %v199
    %v204 = vmul.f32 %v200, %v200
    %v205 = vmul.f32 %v201, %v201
    %206 = vadd.xlane.f32.xlu0 %v202
    %v207 = vpop.xlane.xlu0 %206
    %208 = vadd.xlane.f32.xlu0 %v203
    %v209 = vpop.xlane.xlu0 %208
    %210 = vadd.xlane.f32.xlu0 %v204
    %v211 = vpop.xlane.xlu0 %210
    %212 = vadd.xlane.f32.xlu0 %v205
    %v213 = vpop.xlane.xlu0 %212
    %v214 = vmul.f32 %v194, %v194
    %v215 = vmul.f32 %v195, %v195
    %v216 = vmul.f32 %v196, %v196
    %v217 = vmul.f32 %v197, %v197
    %v218 = vmul.f32 %v214, 80.0
    %v219 = vmul.f32 %v215, 80.0
    %v220 = vmul.f32 %v216, 80.0
    %v221 = vmul.f32 %v217, 80.0
    %v222 = vsub.f32 %v207, %v218
    %v223 = vsub.f32 %v209, %v219
    %v224 = vsub.f32 %v211, %v220
    %v225 = vsub.f32 %v213, %v221
    %v226 = vmul.f32 %v222, 0.020833334
    %v227 = vmul.f32 %v223, 0.020833334
    %v228 = vmul.f32 %v224, 0.020833334
    %v229 = vmul.f32 %v225, 0.020833334
    %v230 = vadd.f32 %v226, 1e-05
    %v231 = vadd.f32 %v227, 1e-05
    %v232 = vadd.f32 %v228, 1e-05
    %v233 = vadd.f32 %v229, 1e-05
    %v234 = vrsqrt.pop %v230
    %v235 = vrsqrt.pop %v231
    %v236 = vrsqrt.pop %v232
    %v237 = vrsqrt.pop %v233
    %v238 = vmul.f32 %v198, %v234
    %v239 = vmul.f32 %v199, %v235
    %v240 = vmul.f32 %v200, %v236
    %v241 = vmul.f32 %v201, %v237
    %v242 = vld [vmem:[%s3] sm:$0x1]
    %v244 = vlaneseq
    %v245 = vshrl.u32 %v244, 7
    %v246 = vsub.s32 0, %v245
    %v247 = vrot.slane %v242, %v246
    %v249 = vmul.f32 %v238, %v247
    %v250 = vmul.f32 %v239, %v247
    %v251 = vmul.f32 %v240, %v247
    %v252 = vmul.f32 %v241, %v247
    %v253 = vld [vmem:[%s4] sm:$0x1]
    %v255 = vlaneseq
    %v256 = vshrl.u32 %v255, 7
    %v257 = vsub.s32 0, %v256
    %v258 = vrot.slane %v253, %v257
    %v260 = vadd.f32 %v249, %v258
    %v261 = vadd.f32 %v250, %v258
    %v262 = vadd.f32 %v251, %v258
    %v263 = vadd.f32 %v252, %v258
    %264 = vst [vmem:[#allocation7] sm:$0xff] %v260
    %265 = vst [vmem:[#allocation7 + $0x8] sm:$0xff] %v261
    %266 = vst [vmem:[#allocation7 + $0x10] sm:$0xff] %v262
    %267 = vst [vmem:[#allocation7 + $0x18] sm:$0xff] %v263
    // Predicated region
    $region30: #{tpu_custom_call.1} parent=1 // pred_check
      _
    $region31: #{tpu_custom_call.1} parent=1 // pred_check_branch
      %269 = sbr.rel (0) target = $region33
    $region32: #{tpu_custom_call.1} parent=1 // pred_region
      %s271 = ssub.s32 512, 512
      %272 = vsyncadd [#allocation4], %s271
      %s273 = sshll.u32 [#allocation7], 4
      %s274 = int_to_ptr.vmem [resolvable:$true] %s273
      %279 = dma.vmem_to_hbm [thread:$0]  %s274, 512, %s5, [#allocation4], 128, 128, 8
    $region33: #{tpu_custom_call.1} parent=1 // pred_fallthru
      _
    // Predicated region
    $region34: #{tpu_custom_call.1} parent=1 // pred_check
      _
    $region35: #{tpu_custom_call.1} parent=1 // pred_check_branch
      %281 = sbr.rel (0) target = $region37
    $region36: #{tpu_custom_call.1} parent=1 // pred_region
      %282 = dma.done [#allocation4], 512
    $region37: #{tpu_custom_call.1} parent=1 // pred_fallthru
      _
    %283 = vsyncpa [#allocation3], 1
    %284 = vsyncpa [#allocation6], 1
    %285 = vsyncpa [#allocation4], 1

// kernel: tpu_custom_call.1
$region0: #{tpu_custom_call.1}
  #allocation0 [shape = 'u32[]', space=smem, size = 0x4, offset = 0x4, fixed_abs, tag = 'smem constant byte address 0x4 - core index']
  #allocation1 [shape = 'u32[144,128]{1,0:T(1,128)}', space=vmem, size = 0x12000, scoped, tag = 'internal scratch']
  %s0 = inlined_call_operand.hbm [shape: bf16[32,128], index: 0, kind: input, shape index: {}]
  %s1 = inlined_call_operand.hbm [shape: bf16[128,128], index: 1, kind: input, shape index: {}]
  %s2 = inlined_call_operand.vmem [shape: f32[1,128], index: 2, kind: input, shape index: {}]
  %s3 = inlined_call_operand.vmem [shape: f32[1,128], index: 3, kind: input, shape index: {}]
  %s4 = inlined_call_operand.vmem [shape: f32[1,128], index: 4, kind: input, shape index: {}]
  %s5 = inlined_call_operand.hbm [shape: f32[32,128], index: 5, kind: output, shape index: {}]
  %s6 = sld [smem:[#allocation0]]
  $region38: #{tpu_custom_call.1} parent=0
    _
  %s8 = ssub.s32 1, %s6
  %s9 = scalar_select 0, %s8, %s6
  $region1: #{tpu_custom_call.1} parent=0
    #allocation2 [shape = 'u8[8192]{0}', space=vmem, size = 0x2000, scoped, tag = 'input window, operand 0, single buffered']
    #allocation3 [shape = 's32[1]{0}', space=sflag, size = 0x4, scoped, tag = 'scoped memory for tpu_custom_call.1']
    #allocation4 [shape = 's32[1]{0}', space=sflag, size = 0x4, scoped, tag = 'scoped memory for tpu_custom_call.1']
    #allocation5 [shape = 'u8[32768]{0}', space=vmem, size = 0x8000, scoped, tag = 'input window, operand 1, single buffered']
    #allocation6 [shape = 's32[1]{0}', space=sflag, size = 0x4, scoped, tag = 'scoped memory for tpu_custom_call.1']
    #allocation7 [shape = 'u8[16384]{0}', space=vmem, size = 0x4000, scoped, tag = 'output window, operand 0, single buffered']
    %10 = vsyncpa [#allocation3], 0
    %11 = vsyncpa [#allocation6], 0
    %12 = vsyncpa [#allocation4], 0
    // Predicated region
    $region2: #{tpu_custom_call.1} parent=1 // pred_check
      _
    $region3: #{tpu_custom_call.1} parent=1 // pred_check_branch
      %14 = sbr.rel (0) target = $region5
    $region4: #{tpu_custom_call.1} parent=1 // pred_region
      %s16 = ssub.s32 256, 256
      %17 = vsyncadd [#allocation3], %s16
      %s18 = sshll.u32 [#allocation2], 4
      %s19 = int_to_ptr.vmem [resolvable:$true] %s18
      %24 = dma.hbm_to_vmem [thread:$0]  %s0, 256, %s19, [#allocation3], 64, 64, 4
    $region5: #{tpu_custom_call.1} parent=1 // pred_fallthru
      _
    // Predicated region
    $region6: #{tpu_custom_call.1} parent=1 // pred_check
      _
    $region7: #{tpu_custom_call.1} parent=1 // pred_check_branch
      %26 = sbr.rel (0) target = $region9
    $region8: #{tpu_custom_call.1} parent=1 // pred_region
      %s28 = ssub.s32 1024, 1024
      %29 = vsyncadd [#allocation6], %s28
      %s30 = sshll.u32 [#allocation5], 4
      %s31 = int_to_ptr.vmem [resolvable:$true] %s30
      %36 = dma.hbm_to_vmem [thread:$0]  %s1, 1024, %s31, [#allocation6], 64, 64, 4
    $region9: #{tpu_custom_call.1} parent=1 // pred_fallthru
      _
    // Predicated region
    $region10: #{tpu_custom_call.1} parent=1 // pred_check
      _
    $region11: #{tpu_custom_call.1} parent=1 // pred_check_branch
      %38 = sbr.rel (0) target = $region13
    $region12: #{tpu_custom_call.1} parent=1 // pred_region
      _
    $region13: #{tpu_custom_call.1} parent=1 // pred_fallthru
      _
    // Predicated region
    $region14: #{tpu_custom_call.1} parent=1 // pred_check
      _
    $region15: #{tpu_custom_call.1} parent=1 // pred_check_branch
      %40 = sbr.rel (0) target = $region17
    $region16: #{tpu_custom_call.1} parent=1 // pred_region
      _
    $region17: #{tpu_custom_call.1} parent=1 // pred_fallthru
      _
    // Predicated region
    $region18: #{tpu_custom_call.1} parent=1 // pred_check
      _
    $region19: #{tpu_custom_call.1} parent=1 // pred_check_branch
      %42 = sbr.rel (0) target = $region21
    $region20: #{tpu_custom_call.1} parent=1 // pred_region
      _
    $region21: #{tpu_custom_call.1} parent=1 // pred_fallthru
      _
    // Predicated region
    $region22: #{tpu_custom_call.1} parent=1 // pred_check
      _
    $region23: #{tpu_custom_call.1} parent=1 // pred_check_branch
      %44 = sbr.rel (0) target = $region25
    $region24: #{tpu_custom_call.1} parent=1 // pred_region
      %45 = dma.done [#allocation3], 256
    $region25: #{tpu_custom_call.1} parent=1 // pred_fallthru
      _
    // Predicated region
    $region26: #{tpu_custom_call.1} parent=1 // pred_check
      _
    $region27: #{tpu_custom_call.1} parent=1 // pred_check_branch
      %47 = sbr.rel (0) target = $region29
    $region28: #{tpu_custom_call.1} parent=1 // pred_region
      %48 = dma.done [#allocation6], 1024
    $region29: #{tpu_custom_call.1} parent=1 // pred_fallthru
      _
    %v50 = vld [vmem:[#allocation2] sm:$0xf]
    %v51 = vld [vmem:[#allocation2 + $0x4] sm:$0xf]
    %v52 = vld [vmem:[#allocation2 + $0x8] sm:$0xf]
    %v53 = vld [vmem:[#allocation2 + $0xc] sm:$0xf]
    %v54 = vld [vmem:[#allocation5] sm:$0xf]
    %v55 = vld [vmem:[#allocation5 + $0x4] sm:$0xf]
    %v56 = vld [vmem:[#allocation5 + $0x8] sm:$0xf]
    %v57 = vld [vmem:[#allocation5 + $0xc] sm:$0xf]
    %v58 = vld [vmem:[#allocation5 + $0x10] sm:$0xf]
    %v59 = vld [vmem:[#allocation5 + $0x14] sm:$0xf]
    %v60 = vld [vmem:[#allocation5 + $0x18] sm:$0xf]
    %v61 = vld [vmem:[#allocation5 + $0x1c] sm:$0xf]
    %v62 = vld [vmem:[#allocation5 + $0x20] sm:$0xf]
    %v63 = vld [vmem:[#allocation5 + $0x24] sm:$0xf]
    %v64 = vld [vmem:[#allocation5 + $0x28] sm:$0xf]
    %v65 = vld [vmem:[#allocation5 + $0x2c] sm:$0xf]
    %v66 = vld [vmem:[#allocation5 + $0x30] sm:$0xf]
    %v67 = vld [vmem:[#allocation5 + $0x34] sm:$0xf]
    %v68 = vld [vmem:[#allocation5 + $0x38] sm:$0xf]
    %v69 = vld [vmem:[#allocation5 + $0x3c] sm:$0xf]
    %v70 = vld [vmem:[%s2] sm:$0x1]
    %v72 = vlaneseq
    %v73 = vshrl.u32 %v72, 7
    %v74 = vsub.s32 0, %v73
    %v75 = vrot.slane %v70, %v74
    %v81 = vunpack.c.l.b16 %v50
    %v82 = vunpack.c.l.b16 %v51
    %v83 = vunpack.c.l.b16 %v52
    %v84 = vunpack.c.l.b16 %v53
    %v85 = vpack.c.b16 %v82, %v81
    %v86 = vpack.c.b16 %v84, %v83
    %v105 = vunpack.c.l.b16 %v54
    %v106 = vunpack.c.l.b16 %v55
    %v107 = vunpack.c.l.b16 %v56
    %v108 = vunpack.c.l.b16 %v57
    %v109 = vunpack.c.l.b16 %v58
    %v110 = vunpack.c.l.b16 %v59
    %v111 = vunpack.c.l.b16 %v60
    %v112 = vunpack.c.l.b16 %v61
    %v113 = vunpack.c.l.b16 %v62
    %v114 = vunpack.c.l.b16 %v63
    %v115 = vunpack.c.l.b16 %v64
    %v116 = vunpack.c.l.b16 %v65
    %v117 = vunpack.c.l.b16 %v66
    %v118 = vunpack.c.l.b16 %v67
    %v119 = vunpack.c.l.b16 %v68
    %v120 = vunpack.c.l.b16 %v69
    %v121 = vpack.c.b16 %v106, %v105
    %v122 = vpack.c.b16 %v108, %v107
    %v123 = vpack.c.b16 %v110, %v109
    %v124 = vpack.c.b16 %v112, %v111
    %v125 = vpack.c.b16 %v114, %v113
    %v126 = vpack.c.b16 %v116, %v115
    %v127 = vpack.c.b16 %v118, %v117
    %v128 = vpack.c.b16 %v120, %v119
    %137 = vmatprep.subr.bf16.mxu0 0
    %138 = vmatpush1.bf16.msra.mxu0 %v128
    %139 = vmatprep.subr.bf16.mxu0 0
    %140 = vmatpush1.bf16.msra.mxu0 %v127
    %141 = vmatprep.subr.bf16.mxu0 0
    %142 = vmatpush1.bf16.msra.mxu0 %v126
    %143 = vmatprep.subr.bf16.mxu0 0
    %144 = vmatpush1.bf16.msra.mxu0 %v125
    %145 = vmatprep.subr.bf16.mxu0 0
    %146 = vmatpush1.bf16.msra.mxu0 %v124
    %147 = vmatprep.subr.bf16.mxu0 0
    %148 = vmatpush1.bf16.msra.mxu0 %v123
    %149 = vmatprep.subr.bf16.mxu0 0
    %150 = vmatpush1.bf16.msra.mxu0 %v122
    %151 = vmatprep.subr.bf16.mxu0 0
    %152 = vmatpush1.bf16.msra.mxu0 %v121
    %153 = vmatprep.subr.bf16.mxu0 0
    %154 = vmatpush2.bf16.msra.mxu0 0
    %155 = vmatprep.subr.bf16.mxu0 0
    %156 = vmatpush2.bf16.msra.mxu0 0
    %157 = vmatprep.subr.bf16.mxu0 0
    %158 = vmatpush2.bf16.msra.mxu0 0
    %159 = vmatprep.subr.bf16.mxu0 0
    %160 = vmatpush2.bf16.msra.mxu0 0
    %161 = vmatprep.subr.bf16.mxu0 0
    %162 = vmatpush2.bf16.msra.mxu0 0
    %163 = vmatprep.subr.bf16.mxu0 0
    %164 = vmatpush2.bf16.msra.mxu0 0
    %165 = vmatprep.subr.bf16.mxu0 0
    %166 = vmatpush2.bf16.msra.mxu0 0
    %167 = vmatprep.subr.bf16.mxu0 0
    %168 = vmatpush2.bf16.msra.mxu0 0
    %169 = vmatprep.mubr.bf16.mxu0 0
    %170 = vmatmul.mubr.bf16.gmra.mxu0 %v85
    %v171 = vpop.f32.mrf.mxu0
    %v172 = vadd.f32 %v75, %v171
    %v173 = vpop.f32.mrf.mxu0
    %v174 = vpop.f32.mrf.mxu0
    %v175 = vadd.f32 %v75, %v174
    %v176 = vpop.f32.mrf.mxu0
    %177 = vmatprep.mubr.bf16.mxu0 0
    %178 = vmatmul.mubr.bf16.gmra.mxu0 %v86
    %v179 = vpop.f32.mrf.mxu0
    %v180 = vadd.f32 %v75, %v179
    %v181 = vpop.f32.mrf.mxu0
    %v182 = vpop.f32.mrf.mxu0
    %v183 = vadd.f32 %v75, %v182
    %v184 = vpop.f32.mrf.mxu0
    %185 = vdwg.mxu0
    %186 = vadd.xlane.f32.xlu0 %v172
    %v187 = vpop.xlane.xlu0 %186
    %188 = vadd.xlane.f32.xlu0 %v175
    %v189 = vpop.xlane.xlu0 %188
    %190 = vadd.xlane.f32.xlu0 %v180
    %v191 = vpop.xlane.xlu0 %190
    %192 = vadd.xlane.f32.xlu0 %v183
    %v193 = vpop.xlane.xlu0 %192
    %v194 = vmul.f32 %v187, 0.020833334
    %v195 = vmul.f32 %v189, 0.020833334
    %v196 = vmul.f32 %v191, 0.020833334
    %v197 = vmul.f32 %v193, 0.020833334
    %v198 = vsub.f32 %v172, %v194
    %v199 = vsub.f32 %v175, %v195
    %v200 = vsub.f32 %v180, %v196
    %v201 = vsub.f32 %v183, %v197
    %v202 = vmul.f32 %v198, %v198
    %v203 = vmul.f32 %v199, %v199
    %v204 = vmul.f32 %v200, %v200
    %v205 = vmul.f32 %v201, %v201
    %206 = vadd.xlane.f32.xlu0 %v202
    %v207 = vpop.xlane.xlu0 %206
    %208 = vadd.xlane.f32.xlu0 %v203
    %v209 = vpop.xlane.xlu0 %208
    %210 = vadd.xlane.f32.xlu0 %v204
    %v211 = vpop.xlane.xlu0 %210
    %212 = vadd.xlane.f32.xlu0 %v205
    %v213 = vpop.xlane.xlu0 %212
    %v214 = vmul.f32 %v194, %v194
    %v215 = vmul.f32 %v195, %v195
    %v216 = vmul.f32 %v196, %v196
    %v217 = vmul.f32 %v197, %v197
    %v218 = vmul.f32 %v214, 80.0
    %v219 = vmul.f32 %v215, 80.0
    %v220 = vmul.f32 %v216, 80.0
    %v221 = vmul.f32 %v217, 80.0
    %v222 = vsub.f32 %v207, %v218
    %v223 = vsub.f32 %v209, %v219
    %v224 = vsub.f32 %v211, %v220
    %v225 = vsub.f32 %v213, %v221
    %v226 = vmul.f32 %v222, 0.020833334
    %v227 = vmul.f32 %v223, 0.020833334
    %v228 = vmul.f32 %v224, 0.020833334
    %v229 = vmul.f32 %v225, 0.020833334
    %v230 = vadd.f32 %v226, 1e-05
    %v231 = vadd.f32 %v227, 1e-05
    %v232 = vadd.f32 %v228, 1e-05
    %v233 = vadd.f32 %v229, 1e-05
    %v234 = vrsqrt.pop %v230
    %v235 = vrsqrt.pop %v231
    %v236 = vrsqrt.pop %v232
    %v237 = vrsqrt.pop %v233
    %v238 = vmul.f32 %v198, %v234
    %v239 = vmul.f32 %v199, %v235
    %v240 = vmul.f32 %v200, %v236
    %v241 = vmul.f32 %v201, %v237
    %v242 = vld [vmem:[%s3] sm:$0x1]
    %v244 = vlaneseq
    %v245 = vshrl.u32 %v244, 7
    %v246 = vsub.s32 0, %v245
    %v247 = vrot.slane %v242, %v246
    %v249 = vmul.f32 %v238, %v247
    %v250 = vmul.f32 %v239, %v247
    %v251 = vmul.f32 %v240, %v247
    %v252 = vmul.f32 %v241, %v247
    %v253 = vld [vmem:[%s4] sm:$0x1]
    %v255 = vlaneseq
    %v256 = vshrl.u32 %v255, 7
    %v257 = vsub.s32 0, %v256
    %v258 = vrot.slane %v253, %v257
    %v260 = vadd.f32 %v249, %v258
    %v261 = vadd.f32 %v250, %v258
    %v262 = vadd.f32 %v251, %v258
    %v263 = vadd.f32 %v252, %v258
    %264 = vst [vmem:[#allocation7] sm:$0xff] %v260
    %265 = vst [vmem:[#allocation7 + $0x8] sm:$0xff] %v261
    %266 = vst [vmem:[#allocation7 + $0x10] sm:$0xff] %v262
    %267 = vst [vmem:[#allocation7 + $0x18] sm:$0xff] %v263
    // Predicated region
    $region30: #{tpu_custom_call.1} parent=1 // pred_check
      _
    $region31: #{tpu_custom_call.1} parent=1 // pred_check_branch
      %269 = sbr.rel (0) target = $region33
    $region32: #{tpu_custom_call.1} parent=1 // pred_region
      %s271 = ssub.s32 512, 512
      %272 = vsyncadd [#allocation4], %s271
      %s273 = sshll.u32 [#allocation7], 4
      %s274 = int_to_ptr.vmem [resolvable:$true] %s273
      %279 = dma.vmem_to_hbm [thread:$0]  %s274, 512, %s5, [#allocation4], 128, 128, 8
    $region33: #{tpu_custom_call.1} parent=1 // pred_fallthru
      _
    // Predicated region
    $region34: #{tpu_custom_call.1} parent=1 // pred_check
      _
    $region35: #{tpu_custom_call.1} parent=1 // pred_check_branch
      %281 = sbr.rel (0) target = $region37
    $region36: #{tpu_custom_call.1} parent=1 // pred_region
      %282 = dma.done [#allocation4], 512
    $region37: #{tpu_custom_call.1} parent=1 // pred_fallthru
      _
    %283 = vsyncpa [#allocation3], 1
    %284 = vsyncpa [#allocation6], 1
    %285 = vsyncpa [#allocation4], 1

</llo_original>
